<compile_context>
chip_gen: v6e
topology: v6e:2x2x1
jax: 0.10.0
libtpu: 0.0.40
codegen_flags: <defaults>
</compile_context>

<pallas_src>
import functools

import jax
import jax.numpy as jnp
from jax import lax
from jax.experimental import pallas as pl
from jax.experimental.pallas import tpu as pltpu


def _round_up(x, m):
    return ((x + m - 1) // m) * m


def _kl_loss_kernel(pred_ref, label_ref, out_ref, *, tile_b, valid_b):
    i = pl.program_id(0)

    x = pred_ref[...].astype(jnp.float32)            # (TB, C)
    y = label_ref[...].astype(jnp.float32) * 10.0    # (TB, C)

    # log_softmax(prediction) per-row stats.
    x_max = jnp.max(x, axis=-1, keepdims=True)       # (TB, 1)
    x_sh = x - x_max
    lse_x = jnp.log(jnp.sum(jnp.exp(x_sh), axis=-1, keepdims=True))  # (TB, 1)

    # softmax(label * 10) per-row stats.
    y_max = jnp.max(y, axis=-1, keepdims=True)       # (TB, 1)
    y_sh = y - y_max
    e = jnp.exp(y_sh)                                # (TB, C)
    denom = jnp.sum(e, axis=-1, keepdims=True)       # (TB, 1)
    log_denom = jnp.log(denom)                       # (TB, 1)
    inv_denom = pl.reciprocal(denom, approx=True)    # (TB, 1), EUP slot

    # Mask out rows past the true batch size (zero-padded rows contribute 0;
    # all intermediate values on padded rows stay finite).
    row = lax.broadcasted_iota(jnp.int32, (tile_b, 1), 0) + i * tile_b
    scale = jnp.where(row < valid_b, inv_denom, 0.0)  # (TB, 1)

    # log(p2) - log(p1) = (y_sh - log_denom) - (x_sh - lse_x)
    t = (y_sh - x_sh) + (lse_x - log_denom)          # (TB, C)

    # p2 * (log p2 - log p1); underflowed e == 0 multiplies a finite value,
    # preserving xlogy(0, 0) = 0 semantics.
    pointwise = e * (scale * t)                      # (TB, C)

    # Lane-dense per-tile partial: reduce over the sublane (row) axis only;
    # the cross-lane reduce happens once in the wrapper.
    out_ref[0, :, :] = jnp.sum(pointwise, axis=0, keepdims=True)


@functools.partial(jax.jit, static_argnames=("tile_b",))
def kl_loss(prediction, label, *, tile_b=None):
    assert prediction.shape == label.shape
    assert prediction.ndim == 2, "expected (batch, classes) inputs"
    B, C = prediction.shape

    if tile_b is None:
        # Keep 2 inputs x 2 pipeline buffers of f32 comfortably inside the
        # scoped VMEM limit on every generation (incl. v7x's 64 MiB VMEM).
        vmem_budget = 8 * 1024 * 1024
        max_rows = max(8, vmem_budget // (2 * 2 * C * 4))
        tile_b = min(1024, max_rows)
        tile_b = max(8, (tile_b // 8) * 8)
        tile_b = min(tile_b, _round_up(B, 8))

    B_pad = _round_up(B, tile_b)
    if B_pad != B:
        pad = B_pad - B
        prediction = jnp.pad(prediction, ((0, pad), (0, 0)))
        label = jnp.pad(label, ((0, pad), (0, 0)))

    num_tiles = B_pad // tile_b
    kernel = functools.partial(_kl_loss_kernel, tile_b=tile_b, valid_b=B)

    partials = pl.pallas_call(
        kernel,
        out_shape=jax.ShapeDtypeStruct((num_tiles, 1, C), jnp.float32),
        grid_spec=pltpu.PrefetchScalarGridSpec(
            num_scalar_prefetch=0,
            grid=(num_tiles,),
            in_specs=[
                pl.BlockSpec((tile_b, C), lambda i: (i, 0)),
                pl.BlockSpec((tile_b, C), lambda i: (i, 0)),
            ],
            out_specs=pl.BlockSpec((1, 1, C), lambda i: (i, 0, 0)),
        ),
        compiler_params=pltpu.CompilerParams(
            # No carried accumulator -> grid axis is independent; lets the
            # runtime shard tiles across both TensorCores on v7x.
            dimension_semantics=("parallel",),
            vmem_limit_bytes=32 * 1024 * 1024,
        ),
    )(prediction, label)

    # Tiny (num_tiles, 1, C) final reduction done in plain XLA.
    return jnp.sum(partials)


def _kl_loss_ref(prediction, label):
    # Pure-JAX reference for sanity checking.
    log_p1 = jax.nn.log_softmax(prediction, axis=1)
    p2 = jax.nn.softmax(label * 10.0, axis=1)
    return jnp.sum(p2 * (jnp.log(p2) - log_p1))


if __name__ == "__main__":
    key = jax.random.PRNGKey(0)
    k1, k2 = jax.random.split(key)

    # Primary small test shape consistent with the module: (batch, classes).
    B, C = 8, 128
    prediction = jax.random.normal(k1, (B, C), dtype=jnp.float32)
    label = jax.random.normal(k2, (B, C), dtype=jnp.float32)

    loss = jax.block_until_ready(kl_loss(prediction, label))
    ref = _kl_loss_ref(prediction, label)
    assert jnp.allclose(loss, ref, rtol=2e-3, atol=1e-3), (loss, ref)

    # Also exercise the padding / row-mask path (B not a multiple of 8).
    k3, k4 = jax.random.split(k2)
    B2 = 50
    pred2 = jax.random.normal(k3, (B2, C), dtype=jnp.float32)
    lab2 = jax.random.normal(k4, (B2, C), dtype=jnp.float32)
    loss2 = jax.block_until_ready(kl_loss(pred2, lab2))
    ref2 = _kl_loss_ref(pred2, lab2)
    assert jnp.allclose(loss2, ref2, rtol=2e-3, atol=1e-3), (loss2, ref2)

    print("KERNEL_OK")
</pallas_src>

<mosaic_0001>
module attributes {stable_mosaic.version = 11 : i64} {
  func.func @_kl_loss_kernel(%arg0: i32, %arg1: memref<8x128xf32, #tpu.memory_space<vmem>>, %arg2: memref<8x128xf32, #tpu.memory_space<vmem>>, %arg3: memref<1x1x128xf32, #tpu.memory_space<vmem>>) attributes {dimension_semantics = [#tpu.dimension_semantics<parallel>], iteration_bounds = array<i64: 1>, scalar_prefetch = 0 : i64, scratch_operands = 0 : i64, tpu.core_type = #tpu.core_type<tc>, window_params = [{transform_indices = @transform_0, window_bounds = array<i64: 8, 128>}, {transform_indices = @transform_1, window_bounds = array<i64: 8, 128>}, {transform_indices = @transform_2, window_bounds = array<i64: 1, 1, 128>}]} {
    %c0 = arith.constant 0 : index
    %c0_0 = arith.constant 0 : index
    %0 = vector.load %arg1[%c0, %c0_0] : memref<8x128xf32, #tpu.memory_space<vmem>>, vector<8x128xf32>
    %c0_1 = arith.constant 0 : index
    %c0_2 = arith.constant 0 : index
    %1 = vector.load %arg2[%c0_1, %c0_2] : memref<8x128xf32, #tpu.memory_space<vmem>>, vector<8x128xf32>
    %cst = arith.constant 1.000000e+01 : f32
    %2 = vector.broadcast %cst : f32 to vector<8x128xf32>
    %3 = arith.mulf %1, %2 : vector<8x128xf32>
    %cst_3 = arith.constant dense<0xFF800000> : vector<8xf32>
    %4 = vector.multi_reduction <maximumf>, %0, %cst_3 [1] : vector<8x128xf32> to vector<8xf32>
    %5 = vector.shape_cast %4 : vector<8xf32> to vector<8x1xf32>
    %6 = vector.broadcast %5 : vector<8x1xf32> to vector<8x128xf32>
    %7 = arith.subf %0, %6 : vector<8x128xf32>
    %8 = math.exp %7 : vector<8x128xf32>
    %cst_4 = arith.constant dense<0.000000e+00> : vector<8xf32>
    %9 = vector.multi_reduction <add>, %8, %cst_4 [1] : vector<8x128xf32> to vector<8xf32>
    %10 = vector.shape_cast %9 : vector<8xf32> to vector<8x1xf32>
    %11 = math.log %10 : vector<8x1xf32>
    %cst_5 = arith.constant dense<0xFF800000> : vector<8xf32>
    %12 = vector.multi_reduction <maximumf>, %3, %cst_5 [1] : vector<8x128xf32> to vector<8xf32>
    %13 = vector.shape_cast %12 : vector<8xf32> to vector<8x1xf32>
    %14 = vector.broadcast %13 : vector<8x1xf32> to vector<8x128xf32>
    %15 = arith.subf %3, %14 : vector<8x128xf32>
    %16 = math.exp %15 : vector<8x128xf32>
    %cst_6 = arith.constant dense<0.000000e+00> : vector<8xf32>
    %17 = vector.multi_reduction <add>, %16, %cst_6 [1] : vector<8x128xf32> to vector<8xf32>
    %18 = vector.shape_cast %17 : vector<8xf32> to vector<8x1xf32>
    %19 = math.log %18 : vector<8x1xf32>
    %20 = tpu.reciprocal %18 {approx = true} : vector<8x1xf32> -> vector<8x1xf32>
    %21 = tpu.iota {dimensions = array<i32: 0>} : vector<8x1xi32>
    %c8_i32 = arith.constant 8 : i32
    %22 = arith.muli %arg0, %c8_i32 : i32
    %23 = vector.broadcast %22 : i32 to vector<8x1xi32>
    %24 = arith.addi %21, %23 : vector<8x1xi32>
    %c8_i32_7 = arith.constant 8 : i32
    %25 = vector.broadcast %c8_i32_7 : i32 to vector<8x1xi32>
    %26 = arith.cmpi slt, %24, %25 : vector<8x1xi32>
    %cst_8 = arith.constant 0.000000e+00 : f32
    %27 = vector.broadcast %cst_8 : f32 to vector<8x1xf32>
    %28 = arith.select %26, %20, %27 : vector<8x1xi1>, vector<8x1xf32>
    %29 = arith.subf %15, %7 : vector<8x128xf32>
    %30 = arith.subf %11, %19 : vector<8x1xf32>
    %31 = vector.broadcast %30 : vector<8x1xf32> to vector<8x128xf32>
    %32 = arith.addf %29, %31 : vector<8x128xf32>
    %33 = vector.broadcast %28 : vector<8x1xf32> to vector<8x128xf32>
    %34 = arith.mulf %33, %32 : vector<8x128xf32>
    %35 = arith.mulf %16, %34 : vector<8x128xf32>
    %cst_9 = arith.constant dense<0.000000e+00> : vector<128xf32>
    %36 = vector.multi_reduction <add>, %35, %cst_9 [0] : vector<8x128xf32> to vector<128xf32>
    %37 = vector.shape_cast %36 : vector<128xf32> to vector<1x128xf32>
    %c0_10 = arith.constant 0 : index
    %c0_11 = arith.constant 0 : index
    %c0_12 = arith.constant 0 : index
    %38 = vector.load %arg3[%c0_10, %c0_11, %c0_12] : memref<1x1x128xf32, #tpu.memory_space<vmem>>, vector<1x1x128xf32>
    %39 = vector.shape_cast %38 : vector<1x1x128xf32> to vector<1x128xf32>
    %40 = vector.shape_cast %37 : vector<1x128xf32> to vector<1x1x128xf32>
    tpu.vector_store %arg3[%c0_10, %c0_11, %c0_12], %40 {strides = array<i32>} : memref<1x1x128xf32, #tpu.memory_space<vmem>>, vector<1x1x128xf32>,
    return
  }
  func.func @transform_0(%arg0: i32) -> (i32, i32) {
    %c0_i32 = arith.constant 0 : i32
    %c0_i32_0 = arith.constant 0 : i32
    return %arg0, %c0_i32 : i32, i32
  }
  func.func @transform_1(%arg0: i32) -> (i32, i32) {
    %c0_i32 = arith.constant 0 : i32
    %c0_i32_0 = arith.constant 0 : i32
    return %arg0, %c0_i32 : i32, i32
  }
  func.func @transform_2(%arg0: i32) -> (i32, i32, i32) {
    %c0_i32 = arith.constant 0 : i32
    %c0_i32_0 = arith.constant 0 : i32
    %c0_i32_1 = arith.constant 0 : i32
    return %arg0, %c0_i32, %c0_i32_0 : i32, i32, i32
  }
}

</mosaic_0001>

<llo_original>
// kernel: kl_loss.1
$region0: #{kl_loss.1}
  #allocation0 [shape = 'u32[]', space=smem, size = 0x4, offset = 0x4, fixed_abs, tag = 'smem constant byte address 0x4 - core index']
  #allocation1 [shape = 'u32[144,128]{1,0:T(1,128)}', space=vmem, size = 0x12000, scoped, tag = 'internal scratch']
  %s0 = inlined_call_operand.hbm [shape: f32[8,128], index: 0, kind: input, shape index: {}]
  %s1 = inlined_call_operand.hbm [shape: f32[8,128], index: 1, kind: input, shape index: {}]
  %s2 = inlined_call_operand.vmem [shape: f32[1,1,128], index: 2, kind: output, shape index: {}]
  %s3 = sld [smem:[#allocation0]]
  $region26: #{kl_loss.1} parent=0
    _
  %s5 = ssub.s32 1, %s3
  %s6 = scalar_select 0, %s5, %s3
  $region1: #{kl_loss.1} parent=0
    #allocation2 [shape = 'u8[4096]{0}', space=vmem, size = 0x1000, scoped, tag = 'input window, operand 0, single buffered']
    #allocation3 [shape = 's32[1]{0}', space=sflag, size = 0x4, scoped, tag = 'scoped memory for kl_loss.1']
    #allocation4 [shape = 'u8[4096]{0}', space=vmem, size = 0x1000, scoped, tag = 'input window, operand 1, single buffered']
    #allocation5 [shape = 's32[1]{0}', space=sflag, size = 0x4, scoped, tag = 'scoped memory for kl_loss.1']
    %7 = vsyncpa [#allocation3], 0
    %8 = vsyncpa [#allocation5], 0
    // Predicated region
    $region2: #{kl_loss.1} parent=1 // pred_check
      _
    $region3: #{kl_loss.1} parent=1 // pred_check_branch
      %10 = sbr.rel (0) target = $region5
    $region4: #{kl_loss.1} parent=1 // pred_region
      %s12 = ssub.s32 128, 128
      %13 = vsyncadd [#allocation3], %s12
      %s15 = sshll.u32 [#allocation2], 4
      %s16 = int_to_ptr.vmem [resolvable:$true] %s15
      %18 = dma.hbm_to_vmem [thread:$0]  %s0, 128, %s16, [#allocation3]
    $region5: #{kl_loss.1} parent=1 // pred_fallthru
      _
    // Predicated region
    $region6: #{kl_loss.1} parent=1 // pred_check
      _
    $region7: #{kl_loss.1} parent=1 // pred_check_branch
      %20 = sbr.rel (0) target = $region9
    $region8: #{kl_loss.1} parent=1 // pred_region
      %s22 = ssub.s32 128, 128
      %23 = vsyncadd [#allocation5], %s22
      %s25 = sshll.u32 [#allocation4], 4
      %s26 = int_to_ptr.vmem [resolvable:$true] %s25
      %28 = dma.hbm_to_vmem [thread:$0]  %s1, 128, %s26, [#allocation5]
    $region9: #{kl_loss.1} parent=1 // pred_fallthru
      _
    // Predicated region
    $region10: #{kl_loss.1} parent=1 // pred_check
      _
    $region11: #{kl_loss.1} parent=1 // pred_check_branch
      %30 = sbr.rel (0) target = $region13
    $region12: #{kl_loss.1} parent=1 // pred_region
      %31 = dma.done [#allocation3], 128
    $region13: #{kl_loss.1} parent=1 // pred_fallthru
      _
    // Predicated region
    $region14: #{kl_loss.1} parent=1 // pred_check
      _
    $region15: #{kl_loss.1} parent=1 // pred_check_branch
      %33 = sbr.rel (0) target = $region17
    $region16: #{kl_loss.1} parent=1 // pred_region
      %34 = dma.done [#allocation5], 128
    $region17: #{kl_loss.1} parent=1 // pred_fallthru
      _
    %v35 = vld [vmem:[#allocation2] sm:$0xff]
    %v36 = vld [vmem:[#allocation4] sm:$0xff]
    %v37 = vmul.f32 %v36, 10.0
    %38 = vmax.xlane.f32.xlu0 %v35
    %v39 = vpop.xlane.xlu0 %38
    %v40 = vsub.f32 %v35, %v39
    %v41 = vmul.f32 %v40, 1.442695
    %v42 = vpow.pop %v41
    %43 = vadd.xlane.f32.xlu0 %v42
    %v44 = vpop.xlane.xlu0 %43
    %v45 = vlog2.pop %v44
    %v46 = vmul.f32 %v45, 0.6931472
    %47 = vmax.xlane.f32.xlu0 %v37
    %v48 = vpop.xlane.xlu0 %47
    %v49 = vsub.f32 %v37, %v48
    %v50 = vmul.f32 %v49, 1.442695
    %v51 = vpow.pop %v50
    %52 = vadd.xlane.f32.xlu0 %v51
    %v53 = vpop.xlane.xlu0 %52
    %v54 = vlog2.pop %v53
    %v55 = vmul.f32 %v54, 0.6931472
    %v56 = vrcp.pop %v53
    %v57 = vlaneseq
    %v58 = vshrl.u32 %v57, 7
    %s59 = smul.u32 0, 8
    %v60 = vstv %s59
    %v61 = vadd.s32 %v58, %v60
    %vm62 = vcmp.lt.s32.totalorder %v61, 8
    %v63 = vsel %vm62, %v56, 0.0
    %v64 = vsub.f32 %v49, %v40
    %v65 = vsub.f32 %v46, %v55
    %v66 = vadd.f32 %v64, %v65
    %v67 = vmul.f32 %v63, %v66
    %v68 = vmul.f32 %v51, %v67
    %v69 = vrot.slane %v68, 4
    %v70 = vadd.f32 %v68, %v69
    %v71 = vrot.slane %v70, 2
    %v72 = vadd.f32 %v70, %v71
    %v73 = vrot.slane %v72, 1
    %v74 = vadd.f32 %v72, %v73
    %75 = vst [vmem:[%s2] sm:$0x1] %v74
    // Predicated region
    $region18: #{kl_loss.1} parent=1 // pred_check
      _
    $region19: #{kl_loss.1} parent=1 // pred_check_branch
      %77 = sbr.rel (0) target = $region21
    $region20: #{kl_loss.1} parent=1 // pred_region
      _
    $region21: #{kl_loss.1} parent=1 // pred_fallthru
      _
    // Predicated region
    $region22: #{kl_loss.1} parent=1 // pred_check
      _
    $region23: #{kl_loss.1} parent=1 // pred_check_branch
      %79 = sbr.rel (0) target = $region25
    $region24: #{kl_loss.1} parent=1 // pred_region
      _
    $region25: #{kl_loss.1} parent=1 // pred_fallthru
      _
    %80 = vsyncpa [#allocation3], 1
    %81 = vsyncpa [#allocation5], 1

</llo_original>
